<compile_context>
chip_gen: v5e
topology: v5e:2x2
jax: 0.10.0
libtpu: 0.0.40
codegen_flags: <defaults>
</compile_context>

<pallas_src>
import functools

import jax
import jax.numpy as jnp
from jax.experimental import pallas as pl
from jax.experimental.pallas import tpu as pltpu


def _prelu(x, alpha):
    # PReLU(x) = x if x > 0 else alpha * x  (PyTorch default: one scalar slope)
    return jnp.where(x > 0, x, alpha * x)


def mge_kernel(alpha_ref,              # SMEM (4,) f32 — PReLU slopes (scalar prefetch)
               x_ref,                  # VMEM (tb, x_dim)
               w1_ref,                 # (x_dim, H)
               b14_ref,                # (4, H)  — biases of layers 1..4, f32
               w2_ref, w3_ref, w4_ref, # (H, H) each
               w5_ref,                 # (H, h_dim)
               b5_ref,                 # (1, h_dim) f32
               o_ref):                 # VMEM (tb, h_dim)
    h = jnp.dot(x_ref[...], w1_ref[...],
                preferred_element_type=jnp.float32) + b14_ref[0:1, :]
    h = _prelu(h, alpha_ref[0])

    h = jnp.dot(h.astype(w2_ref.dtype), w2_ref[...],
                preferred_element_type=jnp.float32) + b14_ref[1:2, :]
    h = _prelu(h, alpha_ref[1])

    h = jnp.dot(h.astype(w3_ref.dtype), w3_ref[...],
                preferred_element_type=jnp.float32) + b14_ref[2:3, :]
    h = _prelu(h, alpha_ref[2])

    h = jnp.dot(h.astype(w4_ref.dtype), w4_ref[...],
                preferred_element_type=jnp.float32) + b14_ref[3:4, :]
    h = _prelu(h, alpha_ref[3])

    h = jnp.dot(h.astype(w5_ref.dtype), w5_ref[...],
                preferred_element_type=jnp.float32) + b5_ref[...]

    o_ref[...] = h.astype(o_ref.dtype)


def _probe_tpu():
    """Best-effort (VMEM capacity bytes, tensorcores-per-chip); safe defaults."""
    vmem_cap = 64 * 1024 * 1024   # conservative (v7x per-TC VMEM)
    n_cores = 1
    try:
        info = pltpu.get_tpu_info()
        vmem_cap = int(getattr(info, "vmem_capacity_bytes", vmem_cap))
        for attr in ("num_tensorcores", "tensorcores_per_chip", "num_cores"):
            v = getattr(info, attr, None)
            if v:
                n_cores = int(v)
                break
    except Exception:
        pass
    return vmem_cap, n_cores


def _round_up8(n):
    return max(8, ((int(n) + 7) // 8) * 8)


@functools.partial(jax.jit, static_argnames=("tile_b", "use_bf16"))
def mixture_gaussian_encoder(x, params, *, tile_b=None, use_bf16=False):
    """params: w1..w5 stored as (in, out), b1..b5 as (1, out), alphas (4,) f32."""
    B, x_dim = x.shape
    H = params["w1"].shape[1]
    h_dim = params["w5"].shape[1]
    out_dtype = x.dtype

    # ---- optional bf16 operands for the MXU (bias-add / PReLU / store stay f32) ----
    mxu_dtype = jnp.bfloat16 if use_bf16 else x.dtype
    itemsize = jnp.dtype(mxu_dtype).itemsize
    xc = x.astype(mxu_dtype)
    w1 = params["w1"].astype(mxu_dtype)
    w2 = params["w2"].astype(mxu_dtype)
    w3 = params["w3"].astype(mxu_dtype)
    w4 = params["w4"].astype(mxu_dtype)
    w5 = params["w5"].astype(mxu_dtype)
    b14 = jnp.concatenate(
        [params["b1"], params["b2"], params["b3"], params["b4"]], axis=0
    ).astype(jnp.float32)                                   # (4, H)
    b5 = params["b5"].astype(jnp.float32)                   # (1, h_dim)

    # ---- batch tile: large default, capped by a VMEM budget ----
    vmem_cap, n_cores = _probe_tpu()
    if tile_b is None:
        tile_b = 2048
    budget = int(vmem_cap * 0.5)                            # headroom for compiler scratch
    weight_bytes = 2 * (itemsize * (x_dim * H + 3 * H * H + H * h_dim)
                        + 4 * (4 * H + h_dim))              # resident operands (x2 buffers)
    # per batch-row VMEM: double-buffered x tile + out tile + f32 intermediates (~2 live)
    per_row = 2 * itemsize * x_dim + 2 * 4 * h_dim + 2 * 4 * H
    tb_cap = max(8, (budget - weight_bytes) // max(per_row, 1))
    tb = min(int(tile_b), int(tb_cap), _round_up8(B))
    tb = _round_up8((tb // 8) * 8)

    # ---- v7x: balance block count across TensorCores (no-op on 1-core chips) ----
    if n_cores > 1 and B >= 16 * n_cores:
        n_blocks = pl.cdiv(B, tb)
        target = max(n_cores, ((n_blocks + n_cores - 1) // n_cores) * n_cores)
        tb = _round_up8(pl.cdiv(B, target))

    n_blocks = pl.cdiv(B, tb)
    b_padded = n_blocks * tb
    xp = xc if b_padded == B else jnp.pad(xc, ((0, b_padded - B), (0, 0)))

    # ---- specs: x/out tiled over batch; weights/biases resident (constant index) ----
    const = lambda i, a: (0, 0)
    grid_spec = pltpu.PrefetchScalarGridSpec(
        num_scalar_prefetch=1,                       # alphas -> SMEM
        grid=(n_blocks,),
        in_specs=[
            pl.BlockSpec((tb, x_dim), lambda i, a: (i, 0)),   # x tile
            pl.BlockSpec((x_dim, H), const),                  # w1
            pl.BlockSpec((4, H), const),                      # b1..b4
            pl.BlockSpec((H, H), const),                      # w2
            pl.BlockSpec((H, H), const),                      # w3
            pl.BlockSpec((H, H), const),                      # w4
            pl.BlockSpec((H, h_dim), const),                  # w5
            pl.BlockSpec((1, h_dim), const),                  # b5
        ],
        out_specs=pl.BlockSpec((tb, h_dim), lambda i, a: (i, 0)),
    )

    # ---- VMEM limit derived from actual buffer sizes (chip-aware cap) ----
    act_bytes = 2 * tb * (itemsize * x_dim + 4 * h_dim)      # x + out, double-buffered
    inter_bytes = 2 * tb * H * 4                             # live f32 intermediates
    need = weight_bytes + act_bytes + inter_bytes
    vmem_limit = int(min(max(32 * 1024 * 1024, 2 * need), int(vmem_cap * 0.75)))

    # ---- consistent cost estimate (advisory) ----
    flops = 2 * b_padded * (x_dim * H + 3 * H * H + H * h_dim)
    bytes_accessed = (b_padded * x_dim * itemsize            # x read
                      + b_padded * h_dim * 4                 # out write
                      + itemsize * (x_dim * H + 3 * H * H + H * h_dim)   # weights
                      + 4 * (4 * H + h_dim)                  # biases
                      + 4 * 4)                               # alphas

    out = pl.pallas_call(
        mge_kernel,
        out_shape=jax.ShapeDtypeStruct((b_padded, h_dim), out_dtype),
        grid_spec=grid_spec,
        compiler_params=pltpu.CompilerParams(
            dimension_semantics=("parallel",),
            vmem_limit_bytes=vmem_limit,
        ),
        cost_estimate=pl.CostEstimate(
            flops=flops, transcendentals=0, bytes_accessed=bytes_accessed),
    )(params["alphas"], xp, w1, b14, w2, w3, w4, w5, b5)

    return out if b_padded == B else out[:B]


def reference_forward(x, params):
    """Pure-JAX reference of the PyTorch module forward (f32 throughout)."""
    h = x
    for i in range(1, 5):
        h = h @ params[f"w{i}"] + params[f"b{i}"]
        a = params["alphas"][i - 1]
        h = jnp.where(h > 0, h, a * h)
    h = h @ params["w5"] + params["b5"]
    return h


def make_params(key, x_dim, H, h_dim):
    """Deterministic synthetic parameters (shapes match nn.Linear/PReLU init)."""
    dims = [(x_dim, H), (H, H), (H, H), (H, H), (H, h_dim)]
    params = {}
    for i, (fin, fout) in enumerate(dims, start=1):
        key, kw, kb = jax.random.split(key, 3)
        bound = 1.0 / jnp.sqrt(fin)
        # stored as (in_features, out_features) — transposed PyTorch layout
        params[f"w{i}"] = jax.random.uniform(kw, (fin, fout), jnp.float32,
                                             minval=-bound, maxval=bound)
        params[f"b{i}"] = jax.random.uniform(kb, (1, fout), jnp.float32,
                                             minval=-bound, maxval=bound)
    # PyTorch PReLU default: single scalar per activation, init = 0.25
    params["alphas"] = jnp.full((4,), 0.25, dtype=jnp.float32)
    return params


if __name__ == "__main__":
    key = jax.random.PRNGKey(0)

    # small shapes implied by the module: params['x_dim'], params['H_dim'], params['h_dim']
    B, x_dim, H, h_dim = 8, 16, 32, 8

    key, kx = jax.random.split(key)
    x = jax.random.normal(kx, (B, x_dim), dtype=jnp.float32)
    params = make_params(key, x_dim, H, h_dim)

    # ---- f32 path, single block ----
    out = jax.block_until_ready(mixture_gaussian_encoder(x, params))
    ref = reference_forward(x, params)
    assert out.shape == (B, h_dim)
    assert jnp.allclose(out, ref, atol=1e-5, rtol=1e-5), "mismatch vs reference"

    # ---- larger batch, small tile to exercise multiple grid blocks + row padding ----
    key, kx2 = jax.random.split(key)
    x_big = jax.random.normal(kx2, (600, x_dim), dtype=jnp.float32)
    out_big = jax.block_until_ready(
        mixture_gaussian_encoder(x_big, params, tile_b=256))
    ref_big = reference_forward(x_big, params)
    assert out_big.shape == (600, h_dim)
    assert jnp.allclose(out_big, ref_big, atol=1e-4, rtol=1e-4), "mismatch (big batch)"

    # ---- optional bf16 MXU path (accuracy tradeoff vs f32 reference) ----
    out_bf16 = jax.block_until_ready(
        mixture_gaussian_encoder(x_big, params, use_bf16=True))
    assert out_bf16.shape == (600, h_dim)
    assert jnp.allclose(out_bf16, ref_big, atol=5e-2, rtol=5e-2), "mismatch (bf16)"

    print("KERNEL_OK")
</pallas_src>

<mosaic_0001>
module attributes {stable_mosaic.version = 11 : i64} {
  func.func @mge_kernel(%arg0: i32, %arg1: memref<4xf32, #tpu.memory_space<smem>>, %arg2: memref<8x16xf32, #tpu.memory_space<vmem>>, %arg3: memref<16x32xf32, #tpu.memory_space<vmem>>, %arg4: memref<4x32xf32, #tpu.memory_space<vmem>>, %arg5: memref<32x32xf32, #tpu.memory_space<vmem>>, %arg6: memref<32x32xf32, #tpu.memory_space<vmem>>, %arg7: memref<32x32xf32, #tpu.memory_space<vmem>>, %arg8: memref<32x8xf32, #tpu.memory_space<vmem>>, %arg9: memref<1x8xf32, #tpu.memory_space<vmem>>, %arg10: memref<8x8xf32, #tpu.memory_space<vmem>>) attributes {dimension_semantics = [#tpu.dimension_semantics<parallel>], iteration_bounds = array<i64: 1>, scalar_prefetch = 1 : i64, scratch_operands = 0 : i64, tpu.core_type = #tpu.core_type<tc>, window_params = [{transform_indices = @transform_0, window_bounds = array<i64: 8, 16>}, {pipeline_mode = #tpu.pipeline_mode<synchronous>, transform_indices = @transform_1, window_bounds = array<i64: 16, 32>}, {pipeline_mode = #tpu.pipeline_mode<synchronous>, transform_indices = @transform_2, window_bounds = array<i64: 4, 32>}, {pipeline_mode = #tpu.pipeline_mode<synchronous>, transform_indices = @transform_3, window_bounds = array<i64: 32, 32>}, {pipeline_mode = #tpu.pipeline_mode<synchronous>, transform_indices = @transform_4, window_bounds = array<i64: 32, 32>}, {pipeline_mode = #tpu.pipeline_mode<synchronous>, transform_indices = @transform_5, window_bounds = array<i64: 32, 32>}, {pipeline_mode = #tpu.pipeline_mode<synchronous>, transform_indices = @transform_6, window_bounds = array<i64: 32, 8>}, {pipeline_mode = #tpu.pipeline_mode<synchronous>, transform_indices = @transform_7, window_bounds = array<i64: 1, 8>}, {transform_indices = @transform_8, window_bounds = array<i64: 8, 8>}]} {
    %c0 = arith.constant 0 : index
    %c0_0 = arith.constant 0 : index
    %0 = vector.load %arg2[%c0, %c0_0] : memref<8x16xf32, #tpu.memory_space<vmem>>, vector<8x16xf32>
    %c0_1 = arith.constant 0 : index
    %c0_2 = arith.constant 0 : index
    %1 = vector.load %arg3[%c0_1, %c0_2] : memref<16x32xf32, #tpu.memory_space<vmem>>, vector<16x32xf32>
    %cst = arith.constant dense<0.000000e+00> : vector<8x32xf32>
    %2 = tpu.matmul %0, %1, %cst {dimension_numbers = #tpu.dot_dimension_numbers<[1], [0], [0], [1], [0, 0, 1, 1], [], []>} : vector<8x16xf32>, vector<16x32xf32>, vector<8x32xf32> -> vector<8x32xf32>
    %c0_3 = arith.constant 0 : index
    %c0_4 = arith.constant 0 : index
    %3 = vector.load %arg4[%c0_3, %c0_4] : memref<4x32xf32, #tpu.memory_space<vmem>>, vector<1x32xf32>
    %4 = vector.broadcast %3 : vector<1x32xf32> to vector<8x32xf32>
    %5 = arith.addf %2, %4 : vector<8x32xf32>
    %c0_5 = arith.constant 0 : index
    %6 = memref.load %arg1[%c0_5] : memref<4xf32, #tpu.memory_space<smem>>
    %cst_6 = arith.constant 0.000000e+00 : f32
    %7 = vector.broadcast %cst_6 : f32 to vector<8x32xf32>
    %8 = arith.cmpf ogt, %5, %7 : vector<8x32xf32>
    %9 = vector.broadcast %6 : f32 to vector<8x32xf32>
    %10 = arith.mulf %9, %5 : vector<8x32xf32>
    %11 = arith.select %8, %5, %10 : vector<8x32xi1>, vector<8x32xf32>
    %c0_7 = arith.constant 0 : index
    %c0_8 = arith.constant 0 : index
    %12 = vector.load %arg5[%c0_7, %c0_8] : memref<32x32xf32, #tpu.memory_space<vmem>>, vector<32x32xf32>
    %cst_9 = arith.constant dense<0.000000e+00> : vector<8x32xf32>
    %13 = tpu.matmul %11, %12, %cst_9 {dimension_numbers = #tpu.dot_dimension_numbers<[1], [0], [0], [1], [0, 0, 1, 1], [], []>} : vector<8x32xf32>, vector<32x32xf32>, vector<8x32xf32> -> vector<8x32xf32>
    %c1 = arith.constant 1 : index
    %c0_10 = arith.constant 0 : index
    %14 = vector.load %arg4[%c1, %c0_10] : memref<4x32xf32, #tpu.memory_space<vmem>>, vector<1x32xf32>
    %15 = vector.broadcast %14 : vector<1x32xf32> to vector<8x32xf32>
    %16 = arith.addf %13, %15 : vector<8x32xf32>
    %c1_11 = arith.constant 1 : index
    %17 = memref.load %arg1[%c1_11] : memref<4xf32, #tpu.memory_space<smem>>
    %cst_12 = arith.constant 0.000000e+00 : f32
    %18 = vector.broadcast %cst_12 : f32 to vector<8x32xf32>
    %19 = arith.cmpf ogt, %16, %18 : vector<8x32xf32>
    %20 = vector.broadcast %17 : f32 to vector<8x32xf32>
    %21 = arith.mulf %20, %16 : vector<8x32xf32>
    %22 = arith.select %19, %16, %21 : vector<8x32xi1>, vector<8x32xf32>
    %c0_13 = arith.constant 0 : index
    %c0_14 = arith.constant 0 : index
    %23 = vector.load %arg6[%c0_13, %c0_14] : memref<32x32xf32, #tpu.memory_space<vmem>>, vector<32x32xf32>
    %cst_15 = arith.constant dense<0.000000e+00> : vector<8x32xf32>
    %24 = tpu.matmul %22, %23, %cst_15 {dimension_numbers = #tpu.dot_dimension_numbers<[1], [0], [0], [1], [0, 0, 1, 1], [], []>} : vector<8x32xf32>, vector<32x32xf32>, vector<8x32xf32> -> vector<8x32xf32>
    %c2 = arith.constant 2 : index
    %c0_16 = arith.constant 0 : index
    %25 = vector.load %arg4[%c2, %c0_16] : memref<4x32xf32, #tpu.memory_space<vmem>>, vector<1x32xf32>
    %26 = vector.broadcast %25 : vector<1x32xf32> to vector<8x32xf32>
    %27 = arith.addf %24, %26 : vector<8x32xf32>
    %c2_17 = arith.constant 2 : index
    %28 = memref.load %arg1[%c2_17] : memref<4xf32, #tpu.memory_space<smem>>
    %cst_18 = arith.constant 0.000000e+00 : f32
    %29 = vector.broadcast %cst_18 : f32 to vector<8x32xf32>
    %30 = arith.cmpf ogt, %27, %29 : vector<8x32xf32>
    %31 = vector.broadcast %28 : f32 to vector<8x32xf32>
    %32 = arith.mulf %31, %27 : vector<8x32xf32>
    %33 = arith.select %30, %27, %32 : vector<8x32xi1>, vector<8x32xf32>
    %c0_19 = arith.constant 0 : index
    %c0_20 = arith.constant 0 : index
    %34 = vector.load %arg7[%c0_19, %c0_20] : memref<32x32xf32, #tpu.memory_space<vmem>>, vector<32x32xf32>
    %cst_21 = arith.constant dense<0.000000e+00> : vector<8x32xf32>
    %35 = tpu.matmul %33, %34, %cst_21 {dimension_numbers = #tpu.dot_dimension_numbers<[1], [0], [0], [1], [0, 0, 1, 1], [], []>} : vector<8x32xf32>, vector<32x32xf32>, vector<8x32xf32> -> vector<8x32xf32>
    %c3 = arith.constant 3 : index
    %c0_22 = arith.constant 0 : index
    %36 = vector.load %arg4[%c3, %c0_22] : memref<4x32xf32, #tpu.memory_space<vmem>>, vector<1x32xf32>
    %37 = vector.broadcast %36 : vector<1x32xf32> to vector<8x32xf32>
    %38 = arith.addf %35, %37 : vector<8x32xf32>
    %c3_23 = arith.constant 3 : index
    %39 = memref.load %arg1[%c3_23] : memref<4xf32, #tpu.memory_space<smem>>
    %cst_24 = arith.constant 0.000000e+00 : f32
    %40 = vector.broadcast %cst_24 : f32 to vector<8x32xf32>
    %41 = arith.cmpf ogt, %38, %40 : vector<8x32xf32>
    %42 = vector.broadcast %39 : f32 to vector<8x32xf32>
    %43 = arith.mulf %42, %38 : vector<8x32xf32>
    %44 = arith.select %41, %38, %43 : vector<8x32xi1>, vector<8x32xf32>
    %c0_25 = arith.constant 0 : index
    %c0_26 = arith.constant 0 : index
    %45 = vector.load %arg8[%c0_25, %c0_26] : memref<32x8xf32, #tpu.memory_space<vmem>>, vector<32x8xf32>
    %cst_27 = arith.constant dense<0.000000e+00> : vector<8x8xf32>
    %46 = tpu.matmul %44, %45, %cst_27 {dimension_numbers = #tpu.dot_dimension_numbers<[1], [0], [0], [1], [0, 0, 1, 1], [], []>} : vector<8x32xf32>, vector<32x8xf32>, vector<8x8xf32> -> vector<8x8xf32>
    %c0_28 = arith.constant 0 : index
    %c0_29 = arith.constant 0 : index
    %47 = vector.load %arg9[%c0_28, %c0_29] : memref<1x8xf32, #tpu.memory_space<vmem>>, vector<1x8xf32>
    %48 = vector.broadcast %47 : vector<1x8xf32> to vector<8x8xf32>
    %49 = arith.addf %46, %48 : vector<8x8xf32>
    %c0_30 = arith.constant 0 : index
    %c0_31 = arith.constant 0 : index
    %50 = vector.load %arg10[%c0_30, %c0_31] : memref<8x8xf32, #tpu.memory_space<vmem>>, vector<8x8xf32>
    tpu.vector_store %arg10[%c0_30, %c0_31], %49 {strides = array<i32>} : memref<8x8xf32, #tpu.memory_space<vmem>>, vector<8x8xf32>,
    return
  }
  func.func @transform_0(%arg0: i32, %arg1: memref<4xf32, #tpu.memory_space<smem>>) -> (i32, i32) {
    %c0_i32 = arith.constant 0 : i32
    %c0_i32_0 = arith.constant 0 : i32
    return %arg0, %c0_i32 : i32, i32
  }
  func.func @transform_1(%arg0: i32, %arg1: memref<4xf32, #tpu.memory_space<smem>>) -> (i32, i32) {
    %c0_i32 = arith.constant 0 : i32
    %c0_i32_0 = arith.constant 0 : i32
    %c0_i32_1 = arith.constant 0 : i32
    return %c0_i32, %c0_i32_0 : i32, i32
  }
  func.func @transform_2(%arg0: i32, %arg1: memref<4xf32, #tpu.memory_space<smem>>) -> (i32, i32) {
    %c0_i32 = arith.constant 0 : i32
    %c0_i32_0 = arith.constant 0 : i32
    %c0_i32_1 = arith.constant 0 : i32
    return %c0_i32, %c0_i32_0 : i32, i32
  }
  func.func @transform_3(%arg0: i32, %arg1: memref<4xf32, #tpu.memory_space<smem>>) -> (i32, i32) {
    %c0_i32 = arith.constant 0 : i32
    %c0_i32_0 = arith.constant 0 : i32
    %c0_i32_1 = arith.constant 0 : i32
    return %c0_i32, %c0_i32_0 : i32, i32
  }
  func.func @transform_4(%arg0: i32, %arg1: memref<4xf32, #tpu.memory_space<smem>>) -> (i32, i32) {
    %c0_i32 = arith.constant 0 : i32
    %c0_i32_0 = arith.constant 0 : i32
    %c0_i32_1 = arith.constant 0 : i32
    return %c0_i32, %c0_i32_0 : i32, i32
  }
  func.func @transform_5(%arg0: i32, %arg1: memref<4xf32, #tpu.memory_space<smem>>) -> (i32, i32) {
    %c0_i32 = arith.constant 0 : i32
    %c0_i32_0 = arith.constant 0 : i32
    %c0_i32_1 = arith.constant 0 : i32
    return %c0_i32, %c0_i32_0 : i32, i32
  }
  func.func @transform_6(%arg0: i32, %arg1: memref<4xf32, #tpu.memory_space<smem>>) -> (i32, i32) {
    %c0_i32 = arith.constant 0 : i32
    %c0_i32_0 = arith.constant 0 : i32
    %c0_i32_1 = arith.constant 0 : i32
    return %c0_i32, %c0_i32_0 : i32, i32
  }
  func.func @transform_7(%arg0: i32, %arg1: memref<4xf32, #tpu.memory_space<smem>>) -> (i32, i32) {
    %c0_i32 = arith.constant 0 : i32
    %c0_i32_0 = arith.constant 0 : i32
    %c0_i32_1 = arith.constant 0 : i32
    return %c0_i32, %c0_i32_0 : i32, i32
  }
  func.func @transform_8(%arg0: i32, %arg1: memref<4xf32, #tpu.memory_space<smem>>) -> (i32, i32) {
    %c0_i32 = arith.constant 0 : i32
    %c0_i32_0 = arith.constant 0 : i32
    return %arg0, %c0_i32 : i32, i32
  }
}

</mosaic_0001>

<llo_original>
// kernel: mixture_gaussian_encoder.1
$region0: #{mixture_gaussian_encoder.1}
  #allocation0 [shape = 'u32[]', space=smem, size = 0x4, offset = 0x4, fixed_abs, tag = 'smem constant byte address 0x4 - core index']
  #allocation1 [shape = 'u32[72,128]{1,0:T(1,128)}', space=vmem, size = 0x9000, scoped, tag = 'internal scratch']
  #allocation2 [shape = 's32[1]{0}', space=sflag, size = 0x4, scoped, tag = 'scoped memory for mixture_gaussian_encoder.1']
  #allocation3 [shape = 'u8[512]{0}', space=smem, size = 0x200, scoped, tag = 'prefetched SMEM operand 0']
  %s0 = inlined_call_operand.hbm [shape: f32[4], index: 0, kind: input, shape index: {}]
  %s1 = inlined_call_operand.hbm [shape: f32[8,16], index: 1, kind: input, shape index: {}]
  %s2 = inlined_call_operand.vmem [shape: f32[16,32], index: 2, kind: input, shape index: {}]
  %s3 = inlined_call_operand.vmem [shape: f32[4,32], index: 3, kind: input, shape index: {}]
  %s4 = inlined_call_operand.vmem [shape: f32[32,32], index: 4, kind: input, shape index: {}]
  %s5 = inlined_call_operand.hbm [shape: f32[32,32], index: 5, kind: input, shape index: {}]
  %s6 = inlined_call_operand.hbm [shape: f32[32,32], index: 6, kind: input, shape index: {}]
  %s7 = inlined_call_operand.vmem [shape: f32[32,8], index: 7, kind: input, shape index: {}]
  %s8 = inlined_call_operand.hbm [shape: f32[1,8], index: 8, kind: input, shape index: {}]
  %s9 = inlined_call_operand.hbm [shape: f32[8,8], index: 9, kind: output, shape index: {}]
  %s10 = sld [smem:[#allocation0]]
  $region58: #{mixture_gaussian_encoder.1} parent=0
    _
  %s12 = ssub.s32 1, %s10
  %s13 = scalar_select 0, %s12, %s10
  %s15 = sshll.u32 %s0, 4
  %s16 = int_to_ptr.hbm [resolvable:$true] %s15
  %18 = dma.hbm_to_smem %s16, 16, [#allocation3], [#allocation2]
  %20 = dma.done [#allocation2], 16
  %21 = sfence
  $region1: #{mixture_gaussian_encoder.1} parent=0
    #allocation4 [shape = 'u8[4096]{0}', space=vmem, size = 0x1000, scoped, tag = 'input window, operand 1, single buffered']
    #allocation5 [shape = 's32[1]{0}', space=sflag, size = 0x4, scoped, tag = 'scoped memory for mixture_gaussian_encoder.1']
    #allocation6 [shape = 's32[1]{0}', space=sflag, size = 0x4, scoped, tag = 'scoped memory for mixture_gaussian_encoder.1']
    #allocation7 [shape = 'u8[16384]{0}', space=vmem, size = 0x4000, scoped, tag = 'input window, operand 5, single buffered']
    #allocation8 [shape = 's32[1]{0}', space=sflag, size = 0x4, scoped, tag = 'scoped memory for mixture_gaussian_encoder.1']
    #allocation9 [shape = 'u8[16384]{0}', space=vmem, size = 0x4000, scoped, tag = 'input window, operand 6, single buffered']
    #allocation10 [shape = 'u8[512]{0}', space=vmem, size = 0x400, scoped, tag = 'input window, operand 8, single buffered']
    #allocation11 [shape = 's32[1]{0}', space=sflag, size = 0x4, scoped, tag = 'scoped memory for mixture_gaussian_encoder.1']
    #allocation12 [shape = 'u8[4096]{0}', space=vmem, size = 0x1000, scoped, tag = 'output window, operand 0, single buffered']
    %22 = vsyncpa [#allocation5], 0
    %23 = vsyncpa [#allocation8], 0
    %24 = vsyncpa [#allocation11], 0
    %25 = vsyncpa [#allocation6], 0
    // Predicated region
    $region2: #{mixture_gaussian_encoder.1} parent=1 // pred_check
      _
    $region3: #{mixture_gaussian_encoder.1} parent=1 // pred_check_branch
      %27 = sbr.rel (0) target = $region5
    $region4: #{mixture_gaussian_encoder.1} parent=1 // pred_region
      %29 = vsyncadd [#allocation5], 0
      %s31 = sshll.u32 %s1, 4
      %s32 = int_to_ptr.hbm [resolvable:$true] %s31
      %s33 = sshll.u32 [#allocation4], 4
      %s34 = int_to_ptr.vmem [resolvable:$true] %s33
      %36 = dma.hbm_to_vmem [thread:$0]  %s32, 128, %s34, [#allocation5]
    $region5: #{mixture_gaussian_encoder.1} parent=1 // pred_fallthru
      _
    // Predicated region
    $region6: #{mixture_gaussian_encoder.1} parent=1 // pred_check
      _
    $region7: #{mixture_gaussian_encoder.1} parent=1 // pred_check_branch
      %38 = sbr.rel (0) target = $region9
    $region8: #{mixture_gaussian_encoder.1} parent=1 // pred_region
      _
    $region9: #{mixture_gaussian_encoder.1} parent=1 // pred_fallthru
      _
    // Predicated region
    $region10: #{mixture_gaussian_encoder.1} parent=1 // pred_check
      _
    $region11: #{mixture_gaussian_encoder.1} parent=1 // pred_check_branch
      %40 = sbr.rel (0) target = $region13
    $region12: #{mixture_gaussian_encoder.1} parent=1 // pred_region
      _
    $region13: #{mixture_gaussian_encoder.1} parent=1 // pred_fallthru
      _
    // Predicated region
    $region14: #{mixture_gaussian_encoder.1} parent=1 // pred_check
      _
    $region15: #{mixture_gaussian_encoder.1} parent=1 // pred_check_branch
      %42 = sbr.rel (0) target = $region17
    $region16: #{mixture_gaussian_encoder.1} parent=1 // pred_region
      _
    $region17: #{mixture_gaussian_encoder.1} parent=1 // pred_fallthru
      _
    // Predicated region
    $region18: #{mixture_gaussian_encoder.1} parent=1 // pred_check
      _
    $region19: #{mixture_gaussian_encoder.1} parent=1 // pred_check_branch
      %44 = sbr.rel (0) target = $region21
    $region20: #{mixture_gaussian_encoder.1} parent=1 // pred_region
      %46 = vsyncadd [#allocation8], 0
      %s47 = sshll.u32 %s5, 4
      %s48 = int_to_ptr.hbm [resolvable:$true] %s47
      %s49 = sshll.u32 [#allocation7], 4
      %s50 = int_to_ptr.vmem [resolvable:$true] %s49
      %55 = dma.hbm_to_vmem [thread:$0]  %s48, 512, %s50, [#allocation8], 128, 128, 8
    $region21: #{mixture_gaussian_encoder.1} parent=1 // pred_fallthru
      _
    // Predicated region
    $region22: #{mixture_gaussian_encoder.1} parent=1 // pred_check
      _
    $region23: #{mixture_gaussian_encoder.1} parent=1 // pred_check_branch
      %57 = sbr.rel (0) target = $region25
    $region24: #{mixture_gaussian_encoder.1} parent=1 // pred_region
      %59 = vsyncadd [#allocation8], 0
      %s60 = sshll.u32 %s6, 4
      %s61 = int_to_ptr.hbm [resolvable:$true] %s60
      %s62 = sshll.u32 [#allocation9], 4
      %s63 = int_to_ptr.vmem [resolvable:$true] %s62
      %68 = dma.hbm_to_vmem [thread:$0]  %s61, 512, %s63, [#allocation8], 128, 128, 8
    $region25: #{mixture_gaussian_encoder.1} parent=1 // pred_fallthru
      _
    // Predicated region
    $region26: #{mixture_gaussian_encoder.1} parent=1 // pred_check
      _
    $region27: #{mixture_gaussian_encoder.1} parent=1 // pred_check_branch
      %70 = sbr.rel (0) target = $region29
    $region28: #{mixture_gaussian_encoder.1} parent=1 // pred_region
      _
    $region29: #{mixture_gaussian_encoder.1} parent=1 // pred_fallthru
      _
    // Predicated region
    $region30: #{mixture_gaussian_encoder.1} parent=1 // pred_check
      _
    $region31: #{mixture_gaussian_encoder.1} parent=1 // pred_check_branch
      %72 = sbr.rel (0) target = $region33
    $region32: #{mixture_gaussian_encoder.1} parent=1 // pred_region
      %74 = vsyncadd [#allocation11], 0
      %s76 = sshll.u32 %s8, 4
      %s77 = int_to_ptr.hbm [resolvable:$true] %s76
      %s78 = sshll.u32 [#allocation10], 4
      %s79 = int_to_ptr.vmem [resolvable:$true] %s78
      %81 = dma.hbm_to_vmem [thread:$0]  %s77, 16, %s79, [#allocation11]
    $region33: #{mixture_gaussian_encoder.1} parent=1 // pred_fallthru
      _
    // Predicated region
    $region34: #{mixture_gaussian_encoder.1} parent=1 // pred_check
      _
    $region35: #{mixture_gaussian_encoder.1} parent=1 // pred_check_branch
      %83 = sbr.rel (0) target = $region37
    $region36: #{mixture_gaussian_encoder.1} parent=1 // pred_region
      %85 = dma.done [#allocation5], 128
    $region37: #{mixture_gaussian_encoder.1} parent=1 // pred_fallthru
      _
    // Predicated region
    $region38: #{mixture_gaussian_encoder.1} parent=1 // pred_check
      _
    $region39: #{mixture_gaussian_encoder.1} parent=1 // pred_check_branch
      %87 = sbr.rel (0) target = $region41
    $region40: #{mixture_gaussian_encoder.1} parent=1 // pred_region
      %89 = dma.done [#allocation8], 512
    $region41: #{mixture_gaussian_encoder.1} parent=1 // pred_fallthru
      _
    // Predicated region
    $region42: #{mixture_gaussian_encoder.1} parent=1 // pred_check
      _
    $region43: #{mixture_gaussian_encoder.1} parent=1 // pred_check_branch
      %91 = sbr.rel (0) target = $region45
    $region44: #{mixture_gaussian_encoder.1} parent=1 // pred_region
      %93 = dma.done [#allocation8], 512
    $region45: #{mixture_gaussian_encoder.1} parent=1 // pred_fallthru
      _
    // Predicated region
    $region46: #{mixture_gaussian_encoder.1} parent=1 // pred_check
      _
    $region47: #{mixture_gaussian_encoder.1} parent=1 // pred_check_branch
      %95 = sbr.rel (0) target = $region49
    $region48: #{mixture_gaussian_encoder.1} parent=1 // pred_region
      %97 = dma.done [#allocation11], 16
    $region49: #{mixture_gaussian_encoder.1} parent=1 // pred_fallthru
      _
    %v98 = vld [vmem:[#allocation4] sm:$0xff]
    %v99 = vld [vmem:[%s2] sm:$0xff]
    %v100 = vld [vmem:[%s2 + $0x8] sm:$0xff]
    %v101 = vld [vmem:[%s3] sm:$0x1]
    %v102 = vperm.slane %v101, 0
    %vm103 = vcmask 130048
    %v105 = vsel %vm103, %v98, 0
    %107 = vmatpush.msra.mxu0 0.0
    %108 = vmatpush.msra.mxu0 0.0
    %109 = vmatpush.msra.mxu0 0.0
    %110 = vmatpush.msra.mxu0 0.0
    %111 = vmatpush.msra.mxu0 0.0
    %112 = vmatpush.msra.mxu0 0.0
    %113 = vmatpush.msra.mxu0 0.0
    %114 = vmatpush.msra.mxu0 0.0
    %115 = vmatpush.msra.mxu0 0.0
    %116 = vmatpush.msra.mxu0 0.0
    %117 = vmatpush.msra.mxu0 0.0
    %118 = vmatpush.msra.mxu0 0.0
    %119 = vmatpush.msra.mxu0 0.0
    %120 = vmatpush.msra.mxu0 0.0
    %121 = vmatpush.msra.mxu0 %v100
    %122 = vmatpush.msra.mxu0 %v99
    %123 = vmatmul.f32.gmra.mxu0 %v105
    %v124 = vpop.f32.mrf.mxu0
    %v125 = vadd.f32 %v102, %v124
    %126 = vdwg.mxu0
    %s127 = sld [smem:[#allocation3]]
    %vm128 = vcmp.gt.f32.partialorder %v125, 0.0
    %v129 = vstv %s127
    %v130 = vmul.f32 %v129, %v125
    %v131 = vsel %vm128, %v125, %v130
    %v132 = vld [vmem:[%s4] sm:$0xff]
    %v133 = vld [vmem:[%s4 + $0x8] sm:$0xff]
    %v134 = vld [vmem:[%s4 + $0x10] sm:$0xff]
    %v135 = vld [vmem:[%s4 + $0x18] sm:$0xff]
    %v136 = vld [vmem:[%s3 + $0x1] sm:$0x1]
    %v137 = vperm.slane %v136, 0
    %vm138 = vcmask 261120
    %v140 = vsel %vm138, %v131, 0
    %142 = vmatpush.msra.mxu0 0.0
    %143 = vmatpush.msra.mxu0 0.0
    %144 = vmatpush.msra.mxu0 0.0
    %145 = vmatpush.msra.mxu0 0.0
    %146 = vmatpush.msra.mxu0 0.0
    %147 = vmatpush.msra.mxu0 0.0
    %148 = vmatpush.msra.mxu0 0.0
    %149 = vmatpush.msra.mxu0 0.0
    %150 = vmatpush.msra.mxu0 0.0
    %151 = vmatpush.msra.mxu0 0.0
    %152 = vmatpush.msra.mxu0 0.0
    %153 = vmatpush.msra.mxu0 0.0
    %154 = vmatpush.msra.mxu0 %v135
    %155 = vmatpush.msra.mxu0 %v134
    %156 = vmatpush.msra.mxu0 %v133
    %157 = vmatpush.msra.mxu0 %v132
    %158 = vmatmul.f32.gmra.mxu0 %v140
    %v159 = vpop.f32.mrf.mxu0
    %v160 = vadd.f32 %v137, %v159
    %161 = vdwg.mxu0
    %s162 = sld [smem:[#allocation3 + $0x1]]
    %vm163 = vcmp.gt.f32.partialorder %v160, 0.0
    %v164 = vstv %s162
    %v165 = vmul.f32 %v164, %v160
    %v166 = vsel %vm163, %v160, %v165
    %v167 = vld [vmem:[#allocation7] sm:$0xff]
    %v168 = vld [vmem:[#allocation7 + $0x8] sm:$0xff]
    %v169 = vld [vmem:[#allocation7 + $0x10] sm:$0xff]
    %v170 = vld [vmem:[#allocation7 + $0x18] sm:$0xff]
    %v171 = vld [vmem:[%s3 + $0x2] sm:$0x1]
    %v172 = vperm.slane %v171, 0
    %v174 = vsel %vm138, %v166, 0
    %176 = vmatpush.msra.mxu0 0.0
    %177 = vmatpush.msra.mxu0 0.0
    %178 = vmatpush.msra.mxu0 0.0
    %179 = vmatpush.msra.mxu0 0.0
    %180 = vmatpush.msra.mxu0 0.0
    %181 = vmatpush.msra.mxu0 0.0
    %182 = vmatpush.msra.mxu0 0.0
    %183 = vmatpush.msra.mxu0 0.0
    %184 = vmatpush.msra.mxu0 0.0
    %185 = vmatpush.msra.mxu0 0.0
    %186 = vmatpush.msra.mxu0 0.0
    %187 = vmatpush.msra.mxu0 0.0
    %188 = vmatpush.msra.mxu0 %v170
    %189 = vmatpush.msra.mxu0 %v169
    %190 = vmatpush.msra.mxu0 %v168
    %191 = vmatpush.msra.mxu0 %v167
    %192 = vmatmul.f32.gmra.mxu0 %v174
    %v193 = vpop.f32.mrf.mxu0
    %v194 = vadd.f32 %v172, %v193
    %195 = vdwg.mxu0
    %s196 = sld [smem:[#allocation3 + $0x2]]
    %vm197 = vcmp.gt.f32.partialorder %v194, 0.0
    %v198 = vstv %s196
    %v199 = vmul.f32 %v198, %v194
    %v200 = vsel %vm197, %v194, %v199
    %v201 = vld [vmem:[#allocation9] sm:$0xff]
    %v202 = vld [vmem:[#allocation9 + $0x8] sm:$0xff]
    %v203 = vld [vmem:[#allocation9 + $0x10] sm:$0xff]
    %v204 = vld [vmem:[#allocation9 + $0x18] sm:$0xff]
    %v205 = vld [vmem:[%s3 + $0x3] sm:$0x1]
    %v206 = vperm.slane %v205, 0
    %v208 = vsel %vm138, %v200, 0
    %210 = vmatpush.msra.mxu0 0.0
    %211 = vmatpush.msra.mxu0 0.0
    %212 = vmatpush.msra.mxu0 0.0
    %213 = vmatpush.msra.mxu0 0.0
    %214 = vmatpush.msra.mxu0 0.0
    %215 = vmatpush.msra.mxu0 0.0
    %216 = vmatpush.msra.mxu0 0.0
    %217 = vmatpush.msra.mxu0 0.0
    %218 = vmatpush.msra.mxu0 0.0
    %219 = vmatpush.msra.mxu0 0.0
    %220 = vmatpush.msra.mxu0 0.0
    %221 = vmatpush.msra.mxu0 0.0
    %222 = vmatpush.msra.mxu0 %v204
    %223 = vmatpush.msra.mxu0 %v203
    %224 = vmatpush.msra.mxu0 %v202
    %225 = vmatpush.msra.mxu0 %v201
    %226 = vmatmul.f32.gmra.mxu0 %v208
    %v227 = vpop.f32.mrf.mxu0
    %v228 = vadd.f32 %v206, %v227
    %229 = vdwg.mxu0
    %s230 = sld [smem:[#allocation3 + $0x3]]
    %vm231 = vcmp.gt.f32.partialorder %v228, 0.0
    %v232 = vstv %s230
    %v233 = vmul.f32 %v232, %v228
    %v234 = vsel %vm231, %v228, %v233
    %v235 = vld [vmem:[%s7] sm:$0xff]
    %v236 = vld [vmem:[%s7 + $0x8] sm:$0xff]
    %v237 = vld [vmem:[%s7 + $0x10] sm:$0xff]
    %v238 = vld [vmem:[%s7 + $0x18] sm:$0xff]
    %v239 = vld [vmem:[#allocation10] sm:$0x1]
    %v241 = vperm.slane %v239, 0
    %v244 = vsel %vm138, %v234, 0
    %246 = vmatpush.msra.mxu0 0.0
    %247 = vmatpush.msra.mxu0 0.0
    %248 = vmatpush.msra.mxu0 0.0
    %249 = vmatpush.msra.mxu0 0.0
    %250 = vmatpush.msra.mxu0 0.0
    %251 = vmatpush.msra.mxu0 0.0
    %252 = vmatpush.msra.mxu0 0.0
    %253 = vmatpush.msra.mxu0 0.0
    %254 = vmatpush.msra.mxu0 0.0
    %255 = vmatpush.msra.mxu0 0.0
    %256 = vmatpush.msra.mxu0 0.0
    %257 = vmatpush.msra.mxu0 0.0
    %258 = vmatpush.msra.mxu0 %v238
    %259 = vmatpush.msra.mxu0 %v237
    %260 = vmatpush.msra.mxu0 %v236
    %261 = vmatpush.msra.mxu0 %v235
    %262 = vmatmul.f32.gmra.mxu0 %v244
    %v263 = vpop.f32.mrf.mxu0
    %v264 = vadd.f32 %v241, %v263
    %265 = vdwg.mxu0
    %vm266 = vcmask 64512
    %267 = vst.msk [vmem:[#allocation12] sm:$0xff] %vm266, %v264
    // Predicated region
    $region50: #{mixture_gaussian_encoder.1} parent=1 // pred_check
      _
    $region51: #{mixture_gaussian_encoder.1} parent=1 // pred_check_branch
      %269 = sbr.rel (0) target = $region53
    $region52: #{mixture_gaussian_encoder.1} parent=1 // pred_region
      %271 = vsyncadd [#allocation6], 0
      %s273 = sshll.u32 [#allocation12], 4
      %s274 = int_to_ptr.vmem [resolvable:$true] %s273
      %s275 = sshll.u32 %s9, 4
      %s276 = int_to_ptr.hbm [resolvable:$true] %s275
      %278 = dma.vmem_to_hbm [thread:$0]  %s274, 128, %s276, [#allocation6]
    $region53: #{mixture_gaussian_encoder.1} parent=1 // pred_fallthru
      _
    // Predicated region
    $region54: #{mixture_gaussian_encoder.1} parent=1 // pred_check
      _
    $region55: #{mixture_gaussian_encoder.1} parent=1 // pred_check_branch
      %280 = sbr.rel (0) target = $region57
    $region56: #{mixture_gaussian_encoder.1} parent=1 // pred_region
      %282 = dma.done [#allocation6], 128
    $region57: #{mixture_gaussian_encoder.1} parent=1 // pred_fallthru
      _
    %283 = vsyncpa [#allocation5], 1
    %284 = vsyncpa [#allocation8], 1
    %285 = vsyncpa [#allocation11], 1
    %286 = vsyncpa [#allocation6], 1

</llo_original>
